<compile_context>
chip_gen: v7x
topology: tpu7x:2x2x1
jax: 0.10.0
libtpu: 0.0.40
codegen_flags: <defaults>
</compile_context>

<pallas_src>
import functools

import jax
import jax.numpy as jnp
from jax import lax
from jax.experimental import pallas as pl
from jax.experimental.pallas import tpu as pltpu


def _vq_kernel(x_ref, e_ref, et_ref, e2_ref, q_ref, sse_ref, *,
               s_total, mxu_xe, mxu_gather):
    """One (batch, spatial-tile) grid step.

    x_ref:   (D, TS)   latents tile (D on sublanes, spatial on lanes)
    e_ref:   (K, D)    codebook                 (resident every step)
    et_ref:  (D, K)    codebook transposed      (resident every step)
    e2_ref:  (K, 1)    ||e_k||^2, precomputed   (resident every step)
    q_ref:   (D, TS)   quantized output tile
    sse_ref: (8, 128)  per-tile sum of squared (quantized - latents),
                       broadcast-filled; reduced in the wrapper.
    """
    x = x_ref[...].astype(jnp.float32)        # (D, TS)
    e = e_ref[...].astype(jnp.float32)        # (K, D)
    et = et_ref[...].astype(jnp.float32)      # (D, K)
    e2 = e2_ref[...].astype(jnp.float32)      # (K, 1)
    d, ts = x.shape
    k = e.shape[0]

    # ||x_s||^2 : cross-sublane reduce, one row of lanes.
    x2 = jnp.sum(x * x, axis=0, keepdims=True)                     # (1, TS)

    # <e_k, x_s>
    if mxu_xe:
        xe = jnp.dot(e, x, preferred_element_type=jnp.float32)     # (K, TS) MXU
    else:
        # tiny D: VPU broadcast-accumulate (avoid a D-wide MXU contraction)
        xe = e[:, 0:1] * x[0:1, :]
        for di in range(1, d):
            xe = xe + e[:, di:di + 1] * x[di:di + 1, :]            # (K, TS)

    # dist[k, s] = ||e_k||^2 + ||x_s||^2 - 2 <e_k, x_s>   (matches torch expr)
    dist = e2 + x2 - 2.0 * xe                                      # (K, TS)

    # argmin over K (sublane axis) with first-index tie-breaking.
    iota_k = lax.broadcasted_iota(jnp.int32, (k, ts), 0)           # (K, TS)
    min_val = jnp.min(dist, axis=0, keepdims=True)                 # (1, TS)
    idx = jnp.min(jnp.where(dist <= min_val, iota_k, k),
                  axis=0, keepdims=True)                           # (1, TS)

    # gather of the winning code vectors
    if mxu_gather:
        one_hot = (iota_k == idx).astype(jnp.float32)              # (K, TS)
        q = jnp.dot(et, one_hot, preferred_element_type=jnp.float32)  # (D, TS) MXU
    else:
        # tiny K: VPU select-accumulate gather
        q = (idx == 0).astype(jnp.float32) * et[:, 0:1]
        for ki in range(1, k):
            q = q + (idx == ki).astype(jnp.float32) * et[:, ki:ki + 1]

    q_ref[...] = q.astype(q_ref.dtype)

    # per-tile sum of squared differences (mask spatial zero-padding columns)
    diff = q - x
    sq = diff * diff
    if s_total % ts != 0:
        col = pl.program_id(1) * ts + lax.broadcasted_iota(jnp.int32, sq.shape, 1)
        sq = jnp.where(col < s_total, sq, 0.0)
    part = jnp.sum(sq)
    sse_ref[...] = jnp.broadcast_to(part, sse_ref.shape).astype(sse_ref.dtype)


def vector_quantizer_forward(latents, embedding, beta=0.25):
    """latents: (B, D, H, W) float32 (NCHW, like the PyTorch module).
    embedding: (K, D) float32 codebook.
    Returns (quantized NCHW, vq_loss scalar)."""
    B, D, H, W = latents.shape
    K, De = embedding.shape
    assert De == D

    S = H * W
    x = latents.reshape(B, D, S)                 # free reshape, stays NCHW-ordered

    # --- spatial tile sizing against an explicit VMEM budget -----------------
    LANE = 128
    VMEM_LIMIT = 32 * 1024 * 1024                # safe on v5e/v6e/v7x (>= defaults)
    BUDGET = 20 * 1024 * 1024                    # leave headroom under the limit
    # x,q double-buffered + (K,TS) dist/one-hot style temporaries, f32
    bytes_per_col = 4 * (6 * D + 5 * K)
    ts_budget = max(LANE, (BUDGET // bytes_per_col) // LANE * LANE)
    s_aligned = ((S + LANE - 1) // LANE) * LANE
    TS = min(s_aligned, ts_budget, 4096)
    num_s = pl.cdiv(S, TS)
    S_pad = num_s * TS
    if S_pad != S:
        x = jnp.pad(x, ((0, 0), (0, 0), (0, S_pad - S)))

    # codebook-derived constants, hoisted out of the kernel body
    e_f32 = embedding.astype(jnp.float32)
    e_t = jnp.transpose(embedding)                               # (D, K)
    e2 = jnp.sum(e_f32 * e_f32, axis=1, keepdims=True)           # (K, 1)

    kernel = functools.partial(
        _vq_kernel,
        s_total=S,
        mxu_xe=(D >= 32),        # feed the MXU only when the contraction is real
        mxu_gather=(K >= 32),
    )

    n_vec = B * S
    cost = pl.CostEstimate(
        flops=int(4 * n_vec * K * D + 8 * n_vec * K),
        transcendentals=0,
        bytes_accessed=int(4 * (2 * B * D * S_pad + 2 * K * D + K)),
    )

    q_pad, partials = pl.pallas_call(
        kernel,
        out_shape=(
            jax.ShapeDtypeStruct((B, D, S_pad), latents.dtype),
            jax.ShapeDtypeStruct((B, num_s, 8, 128), jnp.float32),
        ),
        grid_spec=pltpu.PrefetchScalarGridSpec(
            num_scalar_prefetch=0,
            grid=(B, num_s),
            in_specs=[
                pl.BlockSpec((None, D, TS), lambda b, s: (b, 0, s)),  # latents tile
                pl.BlockSpec((K, D), lambda b, s: (0, 0)),            # codebook
                pl.BlockSpec((D, K), lambda b, s: (0, 0)),            # codebook^T
                pl.BlockSpec((K, 1), lambda b, s: (0, 0)),            # ||e||^2
            ],
            out_specs=[
                pl.BlockSpec((None, D, TS), lambda b, s: (b, 0, s)),        # quantized
                pl.BlockSpec((None, None, 8, 128), lambda b, s: (b, s, 0, 0)),  # sse partials
            ],
        ),
        compiler_params=pltpu.CompilerParams(
            dimension_semantics=("parallel", "parallel"),
            vmem_limit_bytes=VMEM_LIMIT,
        ),
        cost_estimate=cost,
    )(x, embedding, e_t, e2)

    sse = jnp.sum(partials[:, :, 0, 0])
    mse = sse / jnp.float32(B * S * D)
    # In the forward pass commitment_loss == embedding_loss == mse
    # (detach only affects gradients), so:
    vq_loss = mse * beta + mse

    # Straight-through estimator: latents + (quantized - latents).detach()
    # equals quantized numerically in the forward pass. Output is already NCHW.
    if S_pad != S:
        q_pad = q_pad[:, :, :S]
    quantized = q_pad.reshape(B, D, H, W)
    return quantized, vq_loss


if __name__ == "__main__":
    key = jax.random.PRNGKey(0)
    k_lat, k_emb = jax.random.split(key)

    B, D, H, W = 2, 4, 16, 16   # input NCHW, embedding_dim = D
    K = 8                       # num_embeddings
    beta = 0.25

    latents = jax.random.normal(k_lat, (B, D, H, W), dtype=jnp.float32)
    # nn.Embedding(K, D).weight.data.uniform_(-1/K, 1/K)
    embedding = jax.random.uniform(
        k_emb, (K, D), dtype=jnp.float32, minval=-1.0 / K, maxval=1.0 / K
    )

    quantized, vq_loss = vector_quantizer_forward(latents, embedding, beta)
    jax.block_until_ready((quantized, vq_loss))

    # lightweight pure-JAX reference check
    x_ref = jnp.transpose(latents, (0, 2, 3, 1)).reshape(-1, D)
    dist = (jnp.sum(x_ref ** 2, axis=1, keepdims=True)
            + jnp.sum(embedding ** 2, axis=1)
            - 2.0 * x_ref @ embedding.T)
    idx = jnp.argmin(dist, axis=1)
    q_ref = embedding[idx].reshape(B, H, W, D).transpose(0, 3, 1, 2)
    mse_ref = jnp.mean((q_ref - latents) ** 2)
    loss_ref = mse_ref * beta + mse_ref
    assert jnp.allclose(quantized, q_ref, atol=1e-5)
    assert jnp.allclose(vq_loss, loss_ref, atol=1e-5)

    print("KERNEL_OK")
</pallas_src>

<mosaic_0001>
module attributes {stable_mosaic.version = 11 : i64} {
  func.func @_vq_kernel(%arg0: i32, %arg1: i32, %arg2: memref<1x4x256xf32, #tpu.memory_space<vmem>>, %arg3: memref<8x4xf32, #tpu.memory_space<vmem>>, %arg4: memref<4x8xf32, #tpu.memory_space<vmem>>, %arg5: memref<8x1xf32, #tpu.memory_space<vmem>>, %arg6: memref<1x4x256xf32, #tpu.memory_space<vmem>>, %arg7: memref<1x1x8x128xf32, #tpu.memory_space<vmem>>) attributes {dimension_semantics = [#tpu.dimension_semantics<parallel>, #tpu.dimension_semantics<parallel>], iteration_bounds = array<i64: 2, 1>, scalar_prefetch = 0 : i64, scratch_operands = 0 : i64, tpu.core_type = #tpu.core_type<tc>, window_params = [{transform_indices = @transform_0, window_bounds = array<i64: 1, 4, 256>}, {pipeline_mode = #tpu.pipeline_mode<synchronous>, transform_indices = @transform_1, window_bounds = array<i64: 8, 4>}, {pipeline_mode = #tpu.pipeline_mode<synchronous>, transform_indices = @transform_2, window_bounds = array<i64: 4, 8>}, {pipeline_mode = #tpu.pipeline_mode<synchronous>, transform_indices = @transform_3, window_bounds = array<i64: 8, 1>}, {transform_indices = @transform_4, window_bounds = array<i64: 1, 4, 256>}, {transform_indices = @transform_5, window_bounds = array<i64: 1, 1, 8, 128>}]} {
    %c0 = arith.constant 0 : index
    %c0_0 = arith.constant 0 : index
    %c0_1 = arith.constant 0 : index
    %0 = vector.load %arg2[%c0, %c0_0, %c0_1] : memref<1x4x256xf32, #tpu.memory_space<vmem>>, vector<1x4x256xf32>
    %1 = vector.shape_cast %0 : vector<1x4x256xf32> to vector<4x256xf32>
    %c0_2 = arith.constant 0 : index
    %c0_3 = arith.constant 0 : index
    %2 = vector.load %arg3[%c0_2, %c0_3] : memref<8x4xf32, #tpu.memory_space<vmem>>, vector<8x4xf32>
    %c0_4 = arith.constant 0 : index
    %c0_5 = arith.constant 0 : index
    %3 = vector.load %arg4[%c0_4, %c0_5] : memref<4x8xf32, #tpu.memory_space<vmem>>, vector<4x8xf32>
    %c0_6 = arith.constant 0 : index
    %c0_7 = arith.constant 0 : index
    %4 = vector.load %arg5[%c0_6, %c0_7] : memref<8x1xf32, #tpu.memory_space<vmem>>, vector<8x1xf32>
    %5 = arith.mulf %1, %1 : vector<4x256xf32>
    %cst = arith.constant dense<0.000000e+00> : vector<256xf32>
    %6 = vector.multi_reduction <add>, %5, %cst [0] : vector<4x256xf32> to vector<256xf32>
    %7 = vector.shape_cast %6 : vector<256xf32> to vector<1x256xf32>
    %8 = vector.extract_strided_slice %2 {offsets = [0, 0], sizes = [8, 1], strides = [1, 1]} : vector<8x4xf32> to vector<8x1xf32>
    %9 = vector.extract_strided_slice %1 {offsets = [0, 0], sizes = [1, 256], strides = [1, 1]} : vector<4x256xf32> to vector<1x256xf32>
    %10 = vector.broadcast %8 : vector<8x1xf32> to vector<8x256xf32>
    %11 = vector.broadcast %9 : vector<1x256xf32> to vector<8x256xf32>
    %12 = arith.mulf %10, %11 : vector<8x256xf32>
    %13 = vector.extract_strided_slice %2 {offsets = [0, 1], sizes = [8, 1], strides = [1, 1]} : vector<8x4xf32> to vector<8x1xf32>
    %14 = vector.extract_strided_slice %1 {offsets = [1, 0], sizes = [1, 256], strides = [1, 1]} : vector<4x256xf32> to vector<1x256xf32>
    %15 = vector.broadcast %13 : vector<8x1xf32> to vector<8x256xf32>
    %16 = vector.broadcast %14 : vector<1x256xf32> to vector<8x256xf32>
    %17 = arith.mulf %15, %16 : vector<8x256xf32>
    %18 = arith.addf %12, %17 : vector<8x256xf32>
    %19 = vector.extract_strided_slice %2 {offsets = [0, 2], sizes = [8, 1], strides = [1, 1]} : vector<8x4xf32> to vector<8x1xf32>
    %20 = vector.extract_strided_slice %1 {offsets = [2, 0], sizes = [1, 256], strides = [1, 1]} : vector<4x256xf32> to vector<1x256xf32>
    %21 = vector.broadcast %19 : vector<8x1xf32> to vector<8x256xf32>
    %22 = vector.broadcast %20 : vector<1x256xf32> to vector<8x256xf32>
    %23 = arith.mulf %21, %22 : vector<8x256xf32>
    %24 = arith.addf %18, %23 : vector<8x256xf32>
    %25 = vector.extract_strided_slice %2 {offsets = [0, 3], sizes = [8, 1], strides = [1, 1]} : vector<8x4xf32> to vector<8x1xf32>
    %26 = vector.extract_strided_slice %1 {offsets = [3, 0], sizes = [1, 256], strides = [1, 1]} : vector<4x256xf32> to vector<1x256xf32>
    %27 = vector.broadcast %25 : vector<8x1xf32> to vector<8x256xf32>
    %28 = vector.broadcast %26 : vector<1x256xf32> to vector<8x256xf32>
    %29 = arith.mulf %27, %28 : vector<8x256xf32>
    %30 = arith.addf %24, %29 : vector<8x256xf32>
    %31 = vector.broadcast %4 : vector<8x1xf32> to vector<8x256xf32>
    %32 = vector.broadcast %7 : vector<1x256xf32> to vector<8x256xf32>
    %33 = arith.addf %31, %32 : vector<8x256xf32>
    %cst_8 = arith.constant 2.000000e+00 : f32
    %34 = vector.broadcast %cst_8 : f32 to vector<8x256xf32>
    %35 = arith.mulf %34, %30 : vector<8x256xf32>
    %36 = arith.subf %33, %35 : vector<8x256xf32>
    %37 = tpu.iota {dimensions = array<i32: 0>} : vector<8x256xi32>
    %cst_9 = arith.constant dense<0x7F800000> : vector<256xf32>
    %38 = vector.multi_reduction <minimumf>, %36, %cst_9 [0] : vector<8x256xf32> to vector<256xf32>
    %39 = vector.shape_cast %38 : vector<256xf32> to vector<1x256xf32>
    %40 = vector.broadcast %39 : vector<1x256xf32> to vector<8x256xf32>
    %41 = arith.cmpf ole, %36, %40 : vector<8x256xf32>
    %c8_i32 = arith.constant 8 : i32
    %42 = vector.broadcast %c8_i32 : i32 to vector<8x256xi32>
    %43 = arith.select %41, %37, %42 : vector<8x256xi1>, vector<8x256xi32>
    %cst_10 = arith.constant dense<2147483647> : vector<256xi32>
    %44 = vector.multi_reduction <minsi>, %43, %cst_10 [0] : vector<8x256xi32> to vector<256xi32>
    %45 = vector.shape_cast %44 : vector<256xi32> to vector<1x256xi32>
    %c0_i32 = arith.constant 0 : i32
    %46 = vector.broadcast %c0_i32 : i32 to vector<1x256xi32>
    %47 = arith.cmpi eq, %45, %46 : vector<1x256xi32>
    %48 = arith.extui %47 : vector<1x256xi1> to vector<1x256xi32>
    %49 = arith.sitofp %48 : vector<1x256xi32> to vector<1x256xf32>
    %50 = vector.extract_strided_slice %3 {offsets = [0, 0], sizes = [4, 1], strides = [1, 1]} : vector<4x8xf32> to vector<4x1xf32>
    %51 = vector.broadcast %49 : vector<1x256xf32> to vector<4x256xf32>
    %52 = vector.broadcast %50 : vector<4x1xf32> to vector<4x256xf32>
    %53 = arith.mulf %51, %52 : vector<4x256xf32>
    %c1_i32 = arith.constant 1 : i32
    %54 = vector.broadcast %c1_i32 : i32 to vector<1x256xi32>
    %55 = arith.cmpi eq, %45, %54 : vector<1x256xi32>
    %56 = arith.extui %55 : vector<1x256xi1> to vector<1x256xi32>
    %57 = arith.sitofp %56 : vector<1x256xi32> to vector<1x256xf32>
    %58 = vector.extract_strided_slice %3 {offsets = [0, 1], sizes = [4, 1], strides = [1, 1]} : vector<4x8xf32> to vector<4x1xf32>
    %59 = vector.broadcast %57 : vector<1x256xf32> to vector<4x256xf32>
    %60 = vector.broadcast %58 : vector<4x1xf32> to vector<4x256xf32>
    %61 = arith.mulf %59, %60 : vector<4x256xf32>
    %62 = arith.addf %53, %61 : vector<4x256xf32>
    %c2_i32 = arith.constant 2 : i32
    %63 = vector.broadcast %c2_i32 : i32 to vector<1x256xi32>
    %64 = arith.cmpi eq, %45, %63 : vector<1x256xi32>
    %65 = arith.extui %64 : vector<1x256xi1> to vector<1x256xi32>
    %66 = arith.sitofp %65 : vector<1x256xi32> to vector<1x256xf32>
    %67 = vector.extract_strided_slice %3 {offsets = [0, 2], sizes = [4, 1], strides = [1, 1]} : vector<4x8xf32> to vector<4x1xf32>
    %68 = vector.broadcast %66 : vector<1x256xf32> to vector<4x256xf32>
    %69 = vector.broadcast %67 : vector<4x1xf32> to vector<4x256xf32>
    %70 = arith.mulf %68, %69 : vector<4x256xf32>
    %71 = arith.addf %62, %70 : vector<4x256xf32>
    %c3_i32 = arith.constant 3 : i32
    %72 = vector.broadcast %c3_i32 : i32 to vector<1x256xi32>
    %73 = arith.cmpi eq, %45, %72 : vector<1x256xi32>
    %74 = arith.extui %73 : vector<1x256xi1> to vector<1x256xi32>
    %75 = arith.sitofp %74 : vector<1x256xi32> to vector<1x256xf32>
    %76 = vector.extract_strided_slice %3 {offsets = [0, 3], sizes = [4, 1], strides = [1, 1]} : vector<4x8xf32> to vector<4x1xf32>
    %77 = vector.broadcast %75 : vector<1x256xf32> to vector<4x256xf32>
    %78 = vector.broadcast %76 : vector<4x1xf32> to vector<4x256xf32>
    %79 = arith.mulf %77, %78 : vector<4x256xf32>
    %80 = arith.addf %71, %79 : vector<4x256xf32>
    %c4_i32 = arith.constant 4 : i32
    %81 = vector.broadcast %c4_i32 : i32 to vector<1x256xi32>
    %82 = arith.cmpi eq, %45, %81 : vector<1x256xi32>
    %83 = arith.extui %82 : vector<1x256xi1> to vector<1x256xi32>
    %84 = arith.sitofp %83 : vector<1x256xi32> to vector<1x256xf32>
    %85 = vector.extract_strided_slice %3 {offsets = [0, 4], sizes = [4, 1], strides = [1, 1]} : vector<4x8xf32> to vector<4x1xf32>
    %86 = vector.broadcast %84 : vector<1x256xf32> to vector<4x256xf32>
    %87 = vector.broadcast %85 : vector<4x1xf32> to vector<4x256xf32>
    %88 = arith.mulf %86, %87 : vector<4x256xf32>
    %89 = arith.addf %80, %88 : vector<4x256xf32>
    %c5_i32 = arith.constant 5 : i32
    %90 = vector.broadcast %c5_i32 : i32 to vector<1x256xi32>
    %91 = arith.cmpi eq, %45, %90 : vector<1x256xi32>
    %92 = arith.extui %91 : vector<1x256xi1> to vector<1x256xi32>
    %93 = arith.sitofp %92 : vector<1x256xi32> to vector<1x256xf32>
    %94 = vector.extract_strided_slice %3 {offsets = [0, 5], sizes = [4, 1], strides = [1, 1]} : vector<4x8xf32> to vector<4x1xf32>
    %95 = vector.broadcast %93 : vector<1x256xf32> to vector<4x256xf32>
    %96 = vector.broadcast %94 : vector<4x1xf32> to vector<4x256xf32>
    %97 = arith.mulf %95, %96 : vector<4x256xf32>
    %98 = arith.addf %89, %97 : vector<4x256xf32>
    %c6_i32 = arith.constant 6 : i32
    %99 = vector.broadcast %c6_i32 : i32 to vector<1x256xi32>
    %100 = arith.cmpi eq, %45, %99 : vector<1x256xi32>
    %101 = arith.extui %100 : vector<1x256xi1> to vector<1x256xi32>
    %102 = arith.sitofp %101 : vector<1x256xi32> to vector<1x256xf32>
    %103 = vector.extract_strided_slice %3 {offsets = [0, 6], sizes = [4, 1], strides = [1, 1]} : vector<4x8xf32> to vector<4x1xf32>
    %104 = vector.broadcast %102 : vector<1x256xf32> to vector<4x256xf32>
    %105 = vector.broadcast %103 : vector<4x1xf32> to vector<4x256xf32>
    %106 = arith.mulf %104, %105 : vector<4x256xf32>
    %107 = arith.addf %98, %106 : vector<4x256xf32>
    %c7_i32 = arith.constant 7 : i32
    %108 = vector.broadcast %c7_i32 : i32 to vector<1x256xi32>
    %109 = arith.cmpi eq, %45, %108 : vector<1x256xi32>
    %110 = arith.extui %109 : vector<1x256xi1> to vector<1x256xi32>
    %111 = arith.sitofp %110 : vector<1x256xi32> to vector<1x256xf32>
    %112 = vector.extract_strided_slice %3 {offsets = [0, 7], sizes = [4, 1], strides = [1, 1]} : vector<4x8xf32> to vector<4x1xf32>
    %113 = vector.broadcast %111 : vector<1x256xf32> to vector<4x256xf32>
    %114 = vector.broadcast %112 : vector<4x1xf32> to vector<4x256xf32>
    %115 = arith.mulf %113, %114 : vector<4x256xf32>
    %116 = arith.addf %107, %115 : vector<4x256xf32>
    %c0_11 = arith.constant 0 : index
    %c0_12 = arith.constant 0 : index
    %c0_13 = arith.constant 0 : index
    %117 = vector.load %arg6[%c0_11, %c0_12, %c0_13] : memref<1x4x256xf32, #tpu.memory_space<vmem>>, vector<1x4x256xf32>
    %118 = vector.shape_cast %117 : vector<1x4x256xf32> to vector<4x256xf32>
    %119 = vector.shape_cast %116 : vector<4x256xf32> to vector<1x4x256xf32>
    tpu.vector_store %arg6[%c0_11, %c0_12, %c0_13], %119 {strides = array<i32>} : memref<1x4x256xf32, #tpu.memory_space<vmem>>, vector<1x4x256xf32>,
    %120 = arith.subf %116, %1 : vector<4x256xf32>
    %121 = arith.mulf %120, %120 : vector<4x256xf32>
    %122 = vector.shape_cast %121 : vector<4x256xf32> to vector<1x4x256xf32>
    %cst_14 = arith.constant dense<0.000000e+00> : vector<1xf32>
    %123 = vector.multi_reduction <add>, %122, %cst_14 [1, 2] : vector<1x4x256xf32> to vector<1xf32>
    %124 = vector.shape_cast %123 : vector<1xf32> to vector<1x1x1xf32>
    %125 = vector.extract %124[0, 0, 0] : f32 from vector<1x1x1xf32>
    %126 = vector.broadcast %125 : f32 to vector<8x128xf32>
    %c0_15 = arith.constant 0 : index
    %c0_16 = arith.constant 0 : index
    %c0_17 = arith.constant 0 : index
    %c0_18 = arith.constant 0 : index
    %127 = vector.load %arg7[%c0_15, %c0_16, %c0_17, %c0_18] : memref<1x1x8x128xf32, #tpu.memory_space<vmem>>, vector<1x1x8x128xf32>
    %128 = vector.shape_cast %127 : vector<1x1x8x128xf32> to vector<8x128xf32>
    %129 = vector.shape_cast %126 : vector<8x128xf32> to vector<1x1x8x128xf32>
    tpu.vector_store %arg7[%c0_15, %c0_16, %c0_17, %c0_18], %129 {strides = array<i32>} : memref<1x1x8x128xf32, #tpu.memory_space<vmem>>, vector<1x1x8x128xf32>,
    return
  }
  func.func @transform_0(%arg0: i32, %arg1: i32) -> (i32, i32, i32) {
    %c0_i32 = arith.constant 0 : i32
    %c0_i32_0 = arith.constant 0 : i32
    return %arg0, %c0_i32, %arg1 : i32, i32, i32
  }
  func.func @transform_1(%arg0: i32, %arg1: i32) -> (i32, i32) {
    %c0_i32 = arith.constant 0 : i32
    %c0_i32_0 = arith.constant 0 : i32
    %c0_i32_1 = arith.constant 0 : i32
    return %c0_i32, %c0_i32_0 : i32, i32
  }
  func.func @transform_2(%arg0: i32, %arg1: i32) -> (i32, i32) {
    %c0_i32 = arith.constant 0 : i32
    %c0_i32_0 = arith.constant 0 : i32
    %c0_i32_1 = arith.constant 0 : i32
    return %c0_i32, %c0_i32_0 : i32, i32
  }
  func.func @transform_3(%arg0: i32, %arg1: i32) -> (i32, i32) {
    %c0_i32 = arith.constant 0 : i32
    %c0_i32_0 = arith.constant 0 : i32
    %c0_i32_1 = arith.constant 0 : i32
    return %c0_i32, %c0_i32_0 : i32, i32
  }
  func.func @transform_4(%arg0: i32, %arg1: i32) -> (i32, i32, i32) {
    %c0_i32 = arith.constant 0 : i32
    %c0_i32_0 = arith.constant 0 : i32
    return %arg0, %c0_i32, %arg1 : i32, i32, i32
  }
  func.func @transform_5(%arg0: i32, %arg1: i32) -> (i32, i32, i32, i32) {
    %c0_i32 = arith.constant 0 : i32
    %c0_i32_0 = arith.constant 0 : i32
    %c0_i32_1 = arith.constant 0 : i32
    return %arg0, %arg1, %c0_i32, %c0_i32_0 : i32, i32, i32, i32
  }
}

</mosaic_0001>

<llo_original>
// kernel: tpu_custom_call.1
$region0: #{tpu_custom_call.1}
  #allocation0 [shape = 'u32[]', space=smem, size = 0x4, offset = 0x4, fixed_abs, tag = 'smem constant byte address 0x4 - core index']
  #allocation1 [shape = 'u32[144,128]{1,0:T(1,128)}', space=vmem, size = 0x12000, scoped, tag = 'internal scratch']
  %s0 = inlined_call_operand.vmem [shape: f32[2,4,256], index: 0, kind: input, shape index: {}]
  %s1 = inlined_call_operand.vmem [shape: f32[8,4], index: 1, kind: input, shape index: {}]
  %s2 = inlined_call_operand.vmem [shape: f32[4,8], index: 2, kind: input, shape index: {}]
  %s3 = inlined_call_operand.vmem [shape: f32[8,1], index: 3, kind: input, shape index: {}]
  %s4 = inlined_call_operand.hbm [shape: f32[2,4,256], index: 4, kind: output, shape index: {0}]
  %s5 = inlined_call_operand.hbm [shape: f32[2,1,8,128], index: 5, kind: output, shape index: {1}]
  %6 = xla_tuple %s4, %s5
  %s7 = sld [smem:[#allocation0]]
  $region57: #{tpu_custom_call.1} parent=0
    _
  %s9 = ssub.s32 1, %s7
  %s10 = scalar_select 0, %s9, %s7
  $region1: #{tpu_custom_call.1} parent=0
    #allocation2 [shape = 'u8[8192]{0}', space=vmem, size = 0x2000, scoped, tag = 'output window, operand 0']
    #allocation3 [shape = 's32[2]{0}', space=sflag, size = 0x8, scoped, tag = 'scoped memory for tpu_custom_call.1']
    #allocation4 [shape = 'u8[8192]{0}', space=vmem, size = 0x2000, scoped, tag = 'output window, operand 1']
    #allocation5 [shape = 's32[2]{0}', space=sflag, size = 0x8, scoped, tag = 'scoped memory for tpu_custom_call.1']
    %11 = vsyncpa [#allocation3], 0
    %s12 = scalar_lea.sflag [#allocation3], 1
    %13 = vsyncpa %s12, 0
    %14 = vsyncpa [#allocation5], 0
    %s15 = scalar_lea.sflag [#allocation5], 1
    %16 = vsyncpa %s15, 0
    loop: start=0, step=1, limit=4
    $region2: #{tpu_custom_call.1} parent=1 // loop_pre_header
      _
    $region3: #{tpu_custom_call.1} parent=1 // loop_header
      %s18 = sphi 0, %s22
      %p19 = scmp.ge.s32.totalorder %s18, 4
      %s25 = sphi 0, %s37
      %s26 = sphi 0, %s33
      %s27 = sphi 0, %s25
      %s28 = sphi 0, %s26
      %s29 = sphi 0, %s27
      %s30 = sphi 0, %s28
      %s42 = sphi 0, %s44
      %s45 = sphi 0, %s42
      %s46 = sphi 0, %s45
      %s62 = sphi 0, %s46
      %s66 = sphi 0, %s66
      %s68 = sphi 0, %s66
      %s69 = sphi 0, %s68
      %s83 = sphi 0, %s69
      %s87 = sphi 0, %s87
      %s89 = sphi 0, %s87
      %s90 = sphi 0, %s89
      %s104 = sphi 0, %s90
      %s108 = sphi 0, %s108
      %s110 = sphi 0, %s108
      %s111 = sphi 0, %s110
      %s125 = sphi 0, %s111
      %s133 = sphi 0, %s135
      %s136 = sphi 0, %s133
      %s137 = sphi 0, %s136
      %s153 = sphi 0, %s137
      %s161 = sphi 0, %s163
      %s164 = sphi 0, %s161
      %s165 = sphi 0, %s164
      %s181 = sphi 0, %s165
    $region4: #{tpu_custom_call.1} parent=1 // loop_header_branch
      %21 = sbr.rel (%p19) target = $region8
    $region5: #{tpu_custom_call.1} parent=1 // loop_body
      %s23 = ssub.s32 %s18, 1
      %s24 = ssub.s32 %s18, 2
      %s31 = sadd.s32 1, %s26
      %p32 = scmp.ge.s32.totalorder %s31, 1
      %s33 = scalar_select %p32, 0, %s31
      %s34 = sadd.s32 1, %s25
      %s35 = scalar_select %p32, %s34, %s25
      %p36 = scmp.ge.s32.totalorder %s35, 2
      %s37 = scalar_select %p36, 0, %s35
      %s38 = ssub.s32 %s25, %s37
      %s39 = ssub.s32 %s26, %s33
      %s40 = sor.u32 %s38, %s39
      %p41 = scmp.eq.s32.totalorder %s40, 0
      %s43 = sadd.s32 %s42, 1
      %s44 = scalar_select %p41, %s42, %s43
      %p47 = pneg %p41
      %p48 = scmp.eq.s32.totalorder %s18, 1
      %p49 = por %p47, %p48
      %p50 = scmp.ne.s32.totalorder %s42, %s45
      %p51 = scmp.eq.s32.totalorder %s18, 0
      %p52 = por %p50, %p51
      %p53 = scmp.ne.s32.totalorder %s42, %s45
      %p54 = scmp.eq.s32.totalorder %s23, 1
      %p55 = por %p53, %p54
      %p56 = scmp.ne.s32.totalorder %s45, %s46
      %p57 = scmp.eq.s32.totalorder %s23, 0
      %p58 = por %p56, %p57
      %p59 = scmp.ne.s32.totalorder %s45, %s46
      %p60 = scmp.eq.s32.totalorder %s24, 1
      %p61 = por %p59, %p60
      %p63 = scmp.ne.s32.totalorder %s46, %s62
      %p64 = scmp.eq.s32.totalorder %s24, 0
      %p65 = por %p63, %p64
      %s67 = sadd.s32 %s66, 1
      %p70 = scmp.eq.s32.totalorder %s18, 1
      %p71 = scmp.ne.s32.totalorder %s66, %s68
      %p72 = scmp.eq.s32.totalorder %s18, 0
      %p73 = por %p71, %p72
      %p74 = scmp.ne.s32.totalorder %s66, %s68
      %p75 = scmp.eq.s32.totalorder %s23, 1
      %p76 = por %p74, %p75
      %p77 = scmp.ne.s32.totalorder %s68, %s69
      %p78 = scmp.eq.s32.totalorder %s23, 0
      %p79 = por %p77, %p78
      %p80 = scmp.ne.s32.totalorder %s68, %s69
      %p81 = scmp.eq.s32.totalorder %s24, 1
      %p82 = por %p80, %p81
      %p84 = scmp.ne.s32.totalorder %s69, %s83
      %p85 = scmp.eq.s32.totalorder %s24, 0
      %p86 = por %p84, %p85
      %s88 = sadd.s32 %s87, 1
      %p91 = scmp.eq.s32.totalorder %s18, 1
      %p92 = scmp.ne.s32.totalorder %s87, %s89
      %p93 = scmp.eq.s32.totalorder %s18, 0
      %p94 = por %p92, %p93
      %p95 = scmp.ne.s32.totalorder %s87, %s89
      %p96 = scmp.eq.s32.totalorder %s23, 1
      %p97 = por %p95, %p96
      %p98 = scmp.ne.s32.totalorder %s89, %s90
      %p99 = scmp.eq.s32.totalorder %s23, 0
      %p100 = por %p98, %p99
      %p101 = scmp.ne.s32.totalorder %s89, %s90
      %p102 = scmp.eq.s32.totalorder %s24, 1
      %p103 = por %p101, %p102
      %p105 = scmp.ne.s32.totalorder %s90, %s104
      %p106 = scmp.eq.s32.totalorder %s24, 0
      %p107 = por %p105, %p106
      %s109 = sadd.s32 %s108, 1
      %p112 = scmp.eq.s32.totalorder %s18, 1
      %p113 = scmp.ne.s32.totalorder %s108, %s110
      %p114 = scmp.eq.s32.totalorder %s18, 0
      %p115 = por %p113, %p114
      %p116 = scmp.ne.s32.totalorder %s108, %s110
      %p117 = scmp.eq.s32.totalorder %s23, 1
      %p118 = por %p116, %p117
      %p119 = scmp.ne.s32.totalorder %s110, %s111
      %p120 = scmp.eq.s32.totalorder %s23, 0
      %p121 = por %p119, %p120
      %p122 = scmp.ne.s32.totalorder %s110, %s111
      %p123 = scmp.eq.s32.totalorder %s24, 1
      %p124 = por %p122, %p123
      %p126 = scmp.ne.s32.totalorder %s111, %s125
      %p127 = scmp.eq.s32.totalorder %s24, 0
      %p128 = por %p126, %p127
      %s129 = ssub.s32 %s25, %s37
      %s130 = ssub.s32 %s26, %s33
      %s131 = sor.u32 %s129, %s130
      %p132 = scmp.eq.s32.totalorder %s131, 0
      %s134 = sadd.s32 %s133, 1
      %s135 = scalar_select %p132, %s133, %s134
      %p138 = pneg %p132
      %p139 = scmp.eq.s32.totalorder %s18, 1
      %p140 = por %p138, %p139
      %p141 = scmp.ne.s32.totalorder %s133, %s136
      %p142 = scmp.eq.s32.totalorder %s18, 0
      %p143 = por %p141, %p142
      %p144 = scmp.ne.s32.totalorder %s133, %s136
      %p145 = scmp.eq.s32.totalorder %s23, 1
      %p146 = por %p144, %p145
      %p147 = scmp.ne.s32.totalorder %s136, %s137
      %p148 = scmp.eq.s32.totalorder %s23, 0
      %p149 = por %p147, %p148
      %p150 = scmp.ne.s32.totalorder %s136, %s137
      %p151 = scmp.eq.s32.totalorder %s24, 1
      %p152 = por %p150, %p151
      %p154 = scmp.ne.s32.totalorder %s137, %s153
      %p155 = scmp.eq.s32.totalorder %s24, 0
      %p156 = por %p154, %p155
      %s157 = ssub.s32 %s25, %s37
      %s158 = ssub.s32 %s26, %s33
      %s159 = sor.u32 %s157, %s158
      %p160 = scmp.eq.s32.totalorder %s159, 0
      %s162 = sadd.s32 %s161, 1
      %s163 = scalar_select %p160, %s161, %s162
      %p166 = pneg %p160
      %p167 = scmp.eq.s32.totalorder %s18, 1
      %p168 = por %p166, %p167
      %p169 = scmp.ne.s32.totalorder %s161, %s164
      %p170 = scmp.eq.s32.totalorder %s18, 0
      %p171 = por %p169, %p170
      %p172 = scmp.ne.s32.totalorder %s161, %s164
      %p173 = scmp.eq.s32.totalorder %s23, 1
      %p174 = por %p172, %p173
      %p175 = scmp.ne.s32.totalorder %s164, %s165
      %p176 = scmp.eq.s32.totalorder %s23, 0
      %p177 = por %p175, %p176
      %p178 = scmp.ne.s32.totalorder %s164, %s165
      %p179 = scmp.eq.s32.totalorder %s24, 1
      %p180 = por %p178, %p179
      %p182 = scmp.ne.s32.totalorder %s165, %s181
      %p183 = scmp.eq.s32.totalorder %s24, 0
      %p184 = por %p182, %p183
      %p185 = scmp.le.s32.totalorder 1, %s18
      %p186 = scmp.lt.s32.totalorder %s18, 3
      %p187 = pnand %p185, %p186
      %p188 = pneg %p187
      // Predicated region
      $region9: #{tpu_custom_call.1} parent=5 // pred_check
        _
      $region10: #{tpu_custom_call.1} parent=5 // pred_check_branch
        %190 = sbr.rel (%p187) target = $region12
      $region11: #{tpu_custom_call.1} parent=5 // pred_region
        %s191 = ssub.s32 %s18, 1
        // Predicated region
        $region13: #{tpu_custom_call.1} parent=11 // pred_check
          %p192 = pneg %p79
        $region14: #{tpu_custom_call.1} parent=11 // pred_check_branch
          %194 = sbr.rel (%p192) target = $region16
        $region15: #{tpu_custom_call.1} parent=11 // pred_region
          _
        $region16: #{tpu_custom_call.1} parent=11 // pred_fallthru
          _
        // Predicated region
        $region17: #{tpu_custom_call.1} parent=11 // pred_check
          %p195 = pneg %p100
        $region18: #{tpu_custom_call.1} parent=11 // pred_check_branch
          %197 = sbr.rel (%p195) target = $region20
        $region19: #{tpu_custom_call.1} parent=11 // pred_region
          _
        $region20: #{tpu_custom_call.1} parent=11 // pred_fallthru
          _
        // Predicated region
        $region21: #{tpu_custom_call.1} parent=11 // pred_check
          %p198 = pneg %p121
        $region22: #{tpu_custom_call.1} parent=11 // pred_check_branch
          %200 = sbr.rel (%p198) target = $region24
        $region23: #{tpu_custom_call.1} parent=11 // pred_region
          _
        $region24: #{tpu_custom_call.1} parent=11 // pred_fallthru
          _
      $region12: #{tpu_custom_call.1} parent=5 // pred_fallthru
        _
      %p201 = scmp.lt.s32.totalorder %s18, 2
      // Predicated region
      $region25: #{tpu_custom_call.1} parent=5 // pred_check
        %p202 = pneg %p201
      $region26: #{tpu_custom_call.1} parent=5 // pred_check_branch
        %204 = sbr.rel (%p202) target = $region28
      $region27: #{tpu_custom_call.1} parent=5 // pred_region
        // Predicated region
        $region29: #{tpu_custom_call.1} parent=27 // pred_check
          %p205 = pneg %p52
        $region30: #{tpu_custom_call.1} parent=27 // pred_check_branch
          %207 = sbr.rel (%p205) target = $region32
        $region31: #{tpu_custom_call.1} parent=27 // pred_region
          %s208 = smul.u32 2, %s26
          %p209 = scmp.lt.s32.totalorder %s25, 1
          %s210 = scalar_select %p209, %s25, 1
          %p211 = scmp.lt.s32.totalorder %s208, 1
          %s212 = scalar_select %p211, %s208, 1
          %s213 = smul.addr %s210, 2
          %s214 = sadd.s32 %s212, %s213
          %s215 = smul.addr %s214, 4
          %s216 = scalar_lea.vmem %s0, %s215
          %s217 = smul.u32 2, %s26
        $region32: #{tpu_custom_call.1} parent=27 // pred_fallthru
          _
      $region28: #{tpu_custom_call.1} parent=5 // pred_fallthru
        _
      %p218 = scmp.le.s32.totalorder 1, %s18
      %p219 = scmp.lt.s32.totalorder %s18, 3
      %p220 = pnand %p218, %p219
      %p221 = pneg %p220
      // Predicated region
      $region33: #{tpu_custom_call.1} parent=5 // pred_check
        _
      $region34: #{tpu_custom_call.1} parent=5 // pred_check_branch
        %223 = sbr.rel (%p220) target = $region36
      $region35: #{tpu_custom_call.1} parent=5 // pred_region
        %s224 = ssub.s32 %s18, 1
        %s225 = smul.u32 2, %s28
        %p226 = scmp.lt.s32.totalorder %s27, 1
        %s227 = scalar_select %p226, %s27, 1
        %p228 = scmp.lt.s32.totalorder %s225, 1
        %s229 = scalar_select %p228, %s225, 1
        %s230 = smul.addr %s227, 2
        %s231 = sadd.s32 %s229, %s230
        %s232 = smul.addr %s231, 4
        %s233 = scalar_lea.vmem %s0, %s232
        %p234 = pneg %p58
        %p235 = pneg %p55
        %p236 = pneg %p79
        %p237 = pneg %p76
        %p238 = pneg %p100
        %p239 = pneg %p97
        %p240 = pneg %p121
        %p241 = pneg %p118
        %p242 = pneg %p149
        %p243 = pneg %p146
        %s244 = sand.u32 %s136, 1
        %s245 = scalar_lea.sflag [#allocation3], %s244
        %s246 = sand.u32 %s136, 1
        %s247 = smul.addr %s246, 8
        %s248 = scalar_lea.vmem [#allocation2], %s247
        %p249 = pneg %p177
        %p250 = pneg %p174
        %s251 = sand.u32 %s164, 1
        %s252 = scalar_lea.sflag [#allocation5], %s251
        %s253 = sand.u32 %s164, 1
        %s254 = smul.addr %s253, 8
        %s255 = scalar_lea.vmem [#allocation4], %s254
        %s256 = smul.u32 2, %s28
        %p257 = scmp.lt.s32.totalorder %s27, 1
        %s258 = scalar_select %p257, %s27, 1
        %p259 = scmp.lt.s32.totalorder %s256, 1
        %s260 = scalar_select %p259, %s256, 1
        %s261 = smul.addr %s258, 2
        %s262 = sadd.s32 %s260, %s261
        %s263 = smul.addr %s262, 4
        %s264 = scalar_lea.vmem %s0, %s263
        %s265 = smul.u32 2, %s28
        %s266 = smul.u32 2, %s28
        %v267 = vld [vmem:[%s264] sm:$0xff]
        %v268 = vld [vmem:[%s1] sm:$0xff]
        %v269 = vld [vmem:[%s2] sm:$0xf]
        %v270 = vld [vmem:[%s3] sm:$0xff]
        %v271 = vmul.f32 %v267, %v267
        %v273 = vcombine.high %v271, %v271
        %vm275 = vcmask 1043456
        %v276 = vsel %vm275, %v271, 0.0
        %v277 = vrot.slane %v276, 4
        %v278 = vadd.f32 %v276, %v277
        %v279 = vrot.slane %v278, 2
        %v280 = vadd.f32 %v278, %v279
        %v281 = vrot.slane %v280, 1
        %v282 = vadd.f32 %v280, %v281
        %v283 = vsel %vm275, %v273, 0.0
        %v284 = vrot.slane %v283, 4
        %v285 = vadd.f32 %v283, %v284
        %v286 = vrot.slane %v285, 2
        %v287 = vadd.f32 %v285, %v286
        %v288 = vrot.slane %v287, 1
        %v289 = vadd.f32 %v287, %v288
        %291 = vset.pattern.permute.xlu0 0
        %292 = vperm.xlu0 %291, %v268
        %v293 = vpop.permute.xlu0 %292
        %v296 = vlaneseq
        %v297 = vshrl.u32 %v296, 7
        %v298 = vsub.s32 0, %v297
        %v299 = vrot.slane %v267, %v298
        %v300 = vlaneseq
        %v301 = vshrl.u32 %v300, 7
        %v302 = vsub.s32 4, %v301
        %v303 = vrot.slane %v267, %v302
        %v306 = vlaneseq
        %v307 = vshrl.u32 %v306, 7
        %v308 = vsub.s32 0, %v307
        %v309 = vrot.slane %v299, %v308
        %v310 = vlaneseq
        %v311 = vshrl.u32 %v310, 7
        %v312 = vsub.s32 0, %v311
        %v313 = vrot.slane %v303, %v312
        %v314 = vmul.f32 %v293, %v309
        %v315 = vmul.f32 %v293, %v313
        %316 = vset.pattern.permute.xlu0 1
        %317 = vperm.xlu0 %316, %v268
        %v318 = vpop.permute.xlu0 %317
        %v320 = vlaneseq
        %v321 = vshrl.u32 %v320, 7
        %v322 = vsub.s32 1, %v321
        %v323 = vrot.slane %v267, %v322
        %v324 = vlaneseq
        %v325 = vshrl.u32 %v324, 7
        %v326 = vsub.s32 5, %v325
        %v327 = vrot.slane %v267, %v326
        %v330 = vlaneseq
        %v331 = vshrl.u32 %v330, 7
        %v332 = vsub.s32 1, %v331
        %v333 = vrot.slane %v323, %v332
        %v334 = vlaneseq
        %v335 = vshrl.u32 %v334, 7
        %v336 = vsub.s32 1, %v335
        %v337 = vrot.slane %v327, %v336
        %v338 = vmul.f32 %v318, %v333
        %v339 = vmul.f32 %v318, %v337
        %v340 = vadd.f32 %v314, %v338
        %v341 = vadd.f32 %v315, %v339
        %342 = vset.pattern.permute.xlu0 2
        %343 = vperm.xlu0 %342, %v268
        %v344 = vpop.permute.xlu0 %343
        %v346 = vlaneseq
        %v347 = vshrl.u32 %v346, 7
        %v348 = vsub.s32 2, %v347
        %v349 = vrot.slane %v267, %v348
        %v350 = vlaneseq
        %v351 = vshrl.u32 %v350, 7
        %v352 = vsub.s32 6, %v351
        %v353 = vrot.slane %v267, %v352
        %v356 = vlaneseq
        %v357 = vshrl.u32 %v356, 7
        %v358 = vsub.s32 2, %v357
        %v359 = vrot.slane %v349, %v358
        %v360 = vlaneseq
        %v361 = vshrl.u32 %v360, 7
        %v362 = vsub.s32 2, %v361
        %v363 = vrot.slane %v353, %v362
        %v364 = vmul.f32 %v344, %v359
        %v365 = vmul.f32 %v344, %v363
        %v366 = vadd.f32 %v340, %v364
        %v367 = vadd.f32 %v341, %v365
        %368 = vset.pattern.permute.xlu0 3
        %369 = vperm.xlu0 %368, %v268
        %v370 = vpop.permute.xlu0 %369
        %v372 = vlaneseq
        %v373 = vshrl.u32 %v372, 7
        %v374 = vsub.s32 3, %v373
        %v375 = vrot.slane %v267, %v374
        %v376 = vlaneseq
        %v377 = vshrl.u32 %v376, 7
        %v378 = vsub.s32 7, %v377
        %v379 = vrot.slane %v267, %v378
        %v382 = vlaneseq
        %v383 = vshrl.u32 %v382, 7
        %v384 = vsub.s32 3, %v383
        %v385 = vrot.slane %v375, %v384
        %v386 = vlaneseq
        %v387 = vshrl.u32 %v386, 7
        %v388 = vsub.s32 3, %v387
        %v389 = vrot.slane %v379, %v388
        %v390 = vmul.f32 %v370, %v385
        %v391 = vmul.f32 %v370, %v389
        %v392 = vadd.f32 %v366, %v390
        %v393 = vadd.f32 %v367, %v391
        %395 = vset.pattern.permute.xlu0 0
        %396 = vperm.xlu0 %395, %v270
        %v397 = vpop.permute.xlu0 %396
        %v399 = vadd.f32 %v397, %v282
        %v400 = vadd.f32 %v397, %v289
        %v401 = vmul.f32 %v392, 2.0
        %v402 = vmul.f32 %v393, 2.0
        %v403 = vsub.f32 %v399, %v401
        %v404 = vsub.f32 %v400, %v402
        %v405 = vlaneseq
        %v406 = vshrl.u32 %v405, 7
        %v407 = vrot.slane %v403, 4
        %v408 = vmin.f32 %v403, %v407
        %v409 = vrot.slane %v408, 2
        %v410 = vmin.f32 %v408, %v409
        %v411 = vrot.slane %v410, 1
        %v412 = vmin.f32 %v410, %v411
        %v413 = vrot.slane %v404, 4
        %v414 = vmin.f32 %v404, %v413
        %v415 = vrot.slane %v414, 2
        %v416 = vmin.f32 %v414, %v415
        %v417 = vrot.slane %v416, 1
        %v418 = vmin.f32 %v416, %v417
        %vm419 = vcmp.le.f32.partialorder %v403, %v412
        %vm420 = vcmp.le.f32.partialorder %v404, %v418
        %v421 = vsel %vm419, %v406, 8
        %v422 = vsel %vm420, %v406, 8
        %v423 = vrot.slane %v421, 4
        %vm424 = vcmp.lt.s32.totalorder %v421, %v423
        %v425 = vsel %vm424, %v421, %v423
        %v426 = vrot.slane %v425, 2
        %vm427 = vcmp.lt.s32.totalorder %v425, %v426
        %v428 = vsel %vm427, %v425, %v426
        %v429 = vrot.slane %v428, 1
        %vm430 = vcmp.lt.s32.totalorder %v428, %v429
        %v431 = vsel %vm430, %v428, %v429
        %v432 = vrot.slane %v422, 4
        %vm433 = vcmp.lt.s32.totalorder %v422, %v432
        %v434 = vsel %vm433, %v422, %v432
        %v435 = vrot.slane %v434, 2
        %vm436 = vcmp.lt.s32.totalorder %v434, %v435
        %v437 = vsel %vm436, %v434, %v435
        %v438 = vrot.slane %v437, 1
        %vm439 = vcmp.lt.s32.totalorder %v437, %v438
        %v440 = vsel %vm439, %v437, %v438
        %vm441 = vcmp.eq.s32.totalorder %v431, 0
        %vm442 = vcmp.eq.s32.totalorder %v440, 0
        %v443 = vsel %vm441, 1, 0
        %v444 = vsel %vm442, 1, 0
        %v445 = vcvt.s32.f32 %v443
        %v446 = vcvt.s32.f32 %v444
        %448 = vset.pattern.permute.xlu0 0
        %449 = vperm.xlu0 %448, %v269
        %v450 = vpop.permute.xlu0 %449
        %v452 = vmul.f32 %v445, %v450
        %v453 = vmul.f32 %v446, %v450
        %vm454 = vcmp.eq.s32.totalorder %v431, 1
        %vm455 = vcmp.eq.s32.totalorder %v440, 1
        %v456 = vsel %vm454, 1, 0
        %v457 = vsel %vm455, 1, 0
        %v458 = vcvt.s32.f32 %v456
        %v459 = vcvt.s32.f32 %v457
        %460 = vset.pattern.permute.xlu0 1
        %461 = vperm.xlu0 %460, %v269
        %v462 = vpop.permute.xlu0 %461
        %v464 = vmul.f32 %v458, %v462
        %v465 = vmul.f32 %v459, %v462
        %v466 = vadd.f32 %v452, %v464
        %v467 = vadd.f32 %v453, %v465
        %vm468 = vcmp.eq.s32.totalorder %v431, 2
        %vm469 = vcmp.eq.s32.totalorder %v440, 2
        %v470 = vsel %vm468, 1, 0
        %v471 = vsel %vm469, 1, 0
        %v472 = vcvt.s32.f32 %v470
        %v473 = vcvt.s32.f32 %v471
        %474 = vset.pattern.permute.xlu0 2
        %475 = vperm.xlu0 %474, %v269
        %v476 = vpop.permute.xlu0 %475
        %v478 = vmul.f32 %v472, %v476
        %v479 = vmul.f32 %v473, %v476
        %v480 = vadd.f32 %v466, %v478
        %v481 = vadd.f32 %v467, %v479
        %vm482 = vcmp.eq.s32.totalorder %v431, 3
        %vm483 = vcmp.eq.s32.totalorder %v440, 3
        %v484 = vsel %vm482, 1, 0
        %v485 = vsel %vm483, 1, 0
        %v486 = vcvt.s32.f32 %v484
        %v487 = vcvt.s32.f32 %v485
        %488 = vset.pattern.permute.xlu0 3
        %489 = vperm.xlu0 %488, %v269
        %v490 = vpop.permute.xlu0 %489
        %v492 = vmul.f32 %v486, %v490
        %v493 = vmul.f32 %v487, %v490
        %v494 = vadd.f32 %v480, %v492
        %v495 = vadd.f32 %v481, %v493
        %vm496 = vcmp.eq.s32.totalorder %v431, 4
        %vm497 = vcmp.eq.s32.totalorder %v440, 4
        %v498 = vsel %vm496, 1, 0
        %v499 = vsel %vm497, 1, 0
        %v500 = vcvt.s32.f32 %v498
        %v501 = vcvt.s32.f32 %v499
        %502 = vset.pattern.permute.xlu0 4
        %503 = vperm.xlu0 %502, %v269
        %v504 = vpop.permute.xlu0 %503
        %v506 = vmul.f32 %v500, %v504
        %v507 = vmul.f32 %v501, %v504
        %v508 = vadd.f32 %v494, %v506
        %v509 = vadd.f32 %v495, %v507
        %vm510 = vcmp.eq.s32.totalorder %v431, 5
        %vm511 = vcmp.eq.s32.totalorder %v440, 5
        %v512 = vsel %vm510, 1, 0
        %v513 = vsel %vm511, 1, 0
        %v514 = vcvt.s32.f32 %v512
        %v515 = vcvt.s32.f32 %v513
        %516 = vset.pattern.permute.xlu0 5
        %517 = vperm.xlu0 %516, %v269
        %v518 = vpop.permute.xlu0 %517
        %v520 = vmul.f32 %v514, %v518
        %v521 = vmul.f32 %v515, %v518
        %v522 = vadd.f32 %v508, %v520
        %v523 = vadd.f32 %v509, %v521
        %vm524 = vcmp.eq.s32.totalorder %v431, 6
        %vm525 = vcmp.eq.s32.totalorder %v440, 6
        %v526 = vsel %vm524, 1, 0
        %v527 = vsel %vm525, 1, 0
        %v528 = vcvt.s32.f32 %v526
        %v529 = vcvt.s32.f32 %v527
        %530 = vset.pattern.permute.xlu0 6
        %531 = vperm.xlu0 %530, %v269
        %v532 = vpop.permute.xlu0 %531
        %v534 = vmul.f32 %v528, %v532
        %v535 = vmul.f32 %v529, %v532
        %v536 = vadd.f32 %v522, %v534
        %v537 = vadd.f32 %v523, %v535
        %vm538 = vcmp.eq.s32.totalorder %v431, 7
        %vm539 = vcmp.eq.s32.totalorder %v440, 7
        %v540 = vsel %vm538, 1, 0
        %v541 = vsel %vm539, 1, 0
        %v542 = vcvt.s32.f32 %v540
        %v543 = vcvt.s32.f32 %v541
        %544 = vset.pattern.permute.xlu0 7
        %545 = vperm.xlu0 %544, %v269
        %v546 = vpop.permute.xlu0 %545
        %v548 = vmul.f32 %v542, %v546
        %v549 = vmul.f32 %v543, %v546
        %v550 = vadd.f32 %v536, %v548
        %v551 = vadd.f32 %v537, %v549
        %v554 = vcombine.low %v550, %v551
        %556 = vst [vmem:[%s248] sm:$0xff] %v554
        %v557 = vcombine.high %v267, %v267
        %v559 = vsub.f32 %v550, %v267
        %v560 = vsub.f32 %v551, %v557
        %v561 = vmul.f32 %v559, %v559
        %v562 = vmul.f32 %v560, %v560
        %v563 = vsel %vm275, %v561, 0.0
        %v564 = vsel %vm275, %v562, 0.0
        %v565 = vadd.f32 %v563, %v564
        %566 = vadd.xlane.f32.xlu0 %v565
        %v567 = vpop.xlane.xlu0 %566
        %v568 = vrot.slane %v567, 4
        %v569 = vadd.f32 %v567, %v568
        %v570 = vrot.slane %v569, 2
        %v571 = vadd.f32 %v569, %v570
        %v572 = vrot.slane %v571, 1
        %v573 = vadd.f32 %v571, %v572
        %s574 = vtos %v573
        %v575 = vstv %s574
        %576 = vst [vmem:[%s255] sm:$0xff] %v575
        %s577 = sand.u32 %s136, 1
        %s578 = scalar_lea.sflag [#allocation3], %s577
        %s579 = sand.u32 %s136, 1
        %s580 = smul.addr %s579, 8
        %s581 = scalar_lea.vmem [#allocation2], %s580
        %s582 = sand.u32 %s164, 1
        %s583 = scalar_lea.sflag [#allocation5], %s582
        %s584 = sand.u32 %s164, 1
        %s585 = smul.addr %s584, 8
        %s586 = scalar_lea.vmem [#allocation4], %s585
        // Predicated region
        $region37: #{tpu_custom_call.1} parent=35 // pred_check
          %p587 = pneg %p146
        $region38: #{tpu_custom_call.1} parent=35 // pred_check_branch
          %589 = sbr.rel (%p587) target = $region40
        $region39: #{tpu_custom_call.1} parent=35 // pred_region
          %s590 = smul.u32 2, %s28
          %s592 = ssub.s32 128, 128
          %593 = vsyncadd %s578, %s592
          %s594 = smul.addr %s27, 2
          %s595 = sadd.s32 %s590, %s594
          %s596 = smul.addr %s595, 64
          %s597 = scalar_lea.hbm %s4, %s596
          %s599 = sshll.u32 %s581, 4
          %s600 = int_to_ptr.vmem [resolvable:$true] %s599
          %602 = dma.vmem_to_hbm [thread:$0]  %s600, 128, %s597, %s578
        $region40: #{tpu_custom_call.1} parent=35 // pred_fallthru
          _
        // Predicated region
        $region41: #{tpu_custom_call.1} parent=35 // pred_check
          %p603 = pneg %p174
        $region42: #{tpu_custom_call.1} parent=35 // pred_check_branch
          %605 = sbr.rel (%p603) target = $region44
        $region43: #{tpu_custom_call.1} parent=35 // pred_region
          %s607 = ssub.s32 128, 128
          %608 = vsyncadd %s583, %s607
          %s609 = sadd.s32 %s28, %s27
          %s610 = smul.addr %s609, 128
          %s611 = scalar_lea.hbm %s5, %s610
          %s613 = sshll.u32 %s586, 4
          %s614 = int_to_ptr.vmem [resolvable:$true] %s613
          %616 = dma.vmem_to_hbm [thread:$0]  %s614, 128, %s611, %s583
        $region44: #{tpu_custom_call.1} parent=35 // pred_fallthru
          _
      $region36: #{tpu_custom_call.1} parent=5 // pred_fallthru
        _
      %p617 = scmp.le.s32.totalorder 2, %s18
      // Predicated region
      $region45: #{tpu_custom_call.1} parent=5 // pred_check
        %p618 = pneg %p617
      $region46: #{tpu_custom_call.1} parent=5 // pred_check_branch
        %620 = sbr.rel (%p618) target = $region48
      $region47: #{tpu_custom_call.1} parent=5 // pred_region
        %s621 = ssub.s32 %s18, 2
        // Predicated region
        $region49: #{tpu_custom_call.1} parent=47 // pred_check
          %p622 = pneg %p152
        $region50: #{tpu_custom_call.1} parent=47 // pred_check_branch
          %624 = sbr.rel (%p622) target = $region52
        $region51: #{tpu_custom_call.1} parent=47 // pred_region
          %s625 = sand.u32 %s137, 1
          %s626 = scalar_lea.sflag [#allocation3], %s625
          %s627 = sand.u32 %s137, 1
          %s628 = smul.addr %s627, 8
          %s629 = scalar_lea.vmem [#allocation2], %s628
          %630 = dma.done %s626, 128
        $region52: #{tpu_custom_call.1} parent=47 // pred_fallthru
          _
        // Predicated region
        $region53: #{tpu_custom_call.1} parent=47 // pred_check
          %p631 = pneg %p180
        $region54: #{tpu_custom_call.1} parent=47 // pred_check_branch
          %633 = sbr.rel (%p631) target = $region56
        $region55: #{tpu_custom_call.1} parent=47 // pred_region
          %s634 = sand.u32 %s165, 1
          %s635 = scalar_lea.sflag [#allocation5], %s634
          %s636 = sand.u32 %s165, 1
          %s637 = smul.addr %s636, 8
          %s638 = scalar_lea.vmem [#allocation4], %s637
          %639 = dma.done %s635, 128
        $region56: #{tpu_custom_call.1} parent=47 // pred_fallthru
          _
      $region48: #{tpu_custom_call.1} parent=5 // pred_fallthru
        _
    $region6: #{tpu_custom_call.1} parent=1 // loop_footer
      %s22 = sadd.s32 1, %s18
    $region7: #{tpu_custom_call.1} parent=1 // loop_footer_branch
      %17 = sbr.rel target = $region3
    $region8: #{tpu_custom_call.1} parent=1 // loop_exit
      _
    %640 = vsyncpa [#allocation3], 1
    %s641 = scalar_lea.sflag [#allocation3], 1
    %642 = vsyncpa %s641, 1
    %643 = vsyncpa [#allocation5], 1
    %s644 = scalar_lea.sflag [#allocation5], 1
    %645 = vsyncpa %s644, 1

</llo_original>
